<compile_context>
chip_gen: v5e
topology: v5e:2x2
jax: 0.10.0
libtpu: 0.0.40
codegen_flags: <defaults>
</compile_context>

<pallas_src>
import jax
import jax.numpy as jnp
from jax.experimental import pallas as pl
from jax.experimental.pallas import tpu as pltpu


# ----------------------------------------------------------------------------
# Kernel 1: whole-array HBM -> HBM copy via a single DMA descriptor.
# ----------------------------------------------------------------------------
def _dma_copy_kernel(x_hbm, o_hbm, sem):
    cp = pltpu.make_async_copy(x_hbm, o_hbm, sem)
    cp.start()
    cp.wait()


def _dma_copy(x: jax.Array) -> jax.Array:
    return pl.pallas_call(
        _dma_copy_kernel,
        out_shape=jax.ShapeDtypeStruct(x.shape, x.dtype),
        in_specs=[pl.BlockSpec(memory_space=pl.ANY)],
        out_specs=pl.BlockSpec(memory_space=pl.ANY),
        scratch_shapes=[pltpu.SemaphoreType.DMA],
    )(x)


# ----------------------------------------------------------------------------
# Kernel 2: lane-dense tiled VMEM copy (pattern for large conv activations).
# ----------------------------------------------------------------------------
def _tiled_copy_kernel(x_ref, o_ref):
    o_ref[...] = x_ref[...]


def _pick_tm(rows: int, cap: int = 512) -> int:
    """Largest multiple-of-8 divisor of `rows`, capped at `cap` rows."""
    tm = min(cap, rows)
    tm -= tm % 8
    while tm > 8 and rows % tm != 0:
        tm -= 8
    return max(tm, 8)


def _tiled_copy(x2d: jax.Array) -> jax.Array:
    rows, lanes = x2d.shape  # lanes == 128 (full vreg lane width, unmasked vst)
    tm = _pick_tm(rows)
    return pl.pallas_call(
        _tiled_copy_kernel,
        out_shape=jax.ShapeDtypeStruct(x2d.shape, x2d.dtype),
        grid=(rows // tm,),
        in_specs=[pl.BlockSpec((tm, lanes), lambda i: (i, 0))],
        out_specs=pl.BlockSpec((tm, lanes), lambda i: (i, 0)),
        compiler_params=pltpu.CompilerParams(
            # Independent copy tiles: shard across v7x's 2 TCs; no-op on v5e/v6e.
            dimension_semantics=("parallel",),
        ),
    )(x2d)


# ----------------------------------------------------------------------------
# PrintLayer forward.
# ----------------------------------------------------------------------------
def print_layer(x: jax.Array, *, debug: bool = True, materialize=None) -> jax.Array:
    """PyTorch PrintLayer.forward: print(x.shape); return x.

    debug:       emit the per-forward shape print (host callback; gate it off
                 in hot loops — it costs tens of µs, far more than any copy).
    materialize: None   -> zero-copy identity (fastest; default).
                 "dma"  -> single HBM->HBM DMA copy (Pallas).
                 "tiled"-> lane-dense (TM,128) tiled VMEM copy (Pallas).
    """
    if debug:
        # Shape is static in JAX, so bake it into the format string; fires on
        # every invocation, also under jit, matching eager PyTorch.
        jax.debug.print(f"{tuple(x.shape)}")

    if materialize is None:
        return x  # identity: zero data movement on every TPU generation

    if materialize == "dma":
        return _dma_copy(x)

    if materialize == "tiled":
        n = x.size
        rows = n // 128
        if n % 128 != 0 or rows % 8 != 0:
            # Odd sizes: the HBM->HBM DMA needs no (8,128) alignment at all.
            return _dma_copy(x)
        y2d = _tiled_copy(x.reshape(rows, 128))
        return y2d.reshape(x.shape)

    raise ValueError(f"unknown materialize mode: {materialize!r}")


if __name__ == "__main__":
    key = jax.random.PRNGKey(0)
    # Small NCHW input consistent with a conv-style generator/discriminator stack.
    x = jax.random.normal(key, (2, 4, 16, 16), dtype=jnp.float32)

    # Fast path: identity + per-forward shape print (matches PyTorch eager).
    y_fast = jax.block_until_ready(print_layer(x))

    # Pallas paths, exercised once each so the kernels compile & run on TPU.
    y_dma = jax.block_until_ready(print_layer(x, debug=False, materialize="dma"))
    y_tiled = jax.block_until_ready(print_layer(x, debug=False, materialize="tiled"))

    for y in (y_fast, y_dma, y_tiled):
        assert y.shape == x.shape and y.dtype == x.dtype
        assert bool(jnp.all(y == x))
    print("KERNEL_OK")
</pallas_src>

<mosaic_0001>
module attributes {stable_mosaic.version = 11 : i64} {
  func.func @_dma_copy_kernel(%arg0: memref<2x4x16x16xf32, #tpu.memory_space<any>>, %arg1: memref<2x4x16x16xf32, #tpu.memory_space<any>>, %arg2: memref<!tpu.dma_semaphore, #tpu.memory_space<semaphore_mem>>) attributes {dimension_semantics = [], scalar_prefetch = 0 : i64, scratch_operands = 1 : i64, tpu.core_type = #tpu.core_type<tc>} {
    tpu.enqueue_dma source(%arg0 : memref<2x4x16x16xf32, #tpu.memory_space<any>>) target(%arg1 : memref<2x4x16x16xf32, #tpu.memory_space<any>>) target_semaphore(%arg2 : memref<!tpu.dma_semaphore, #tpu.memory_space<semaphore_mem>>)
    tpu.wait_dma2 semaphore(%arg2 : memref<!tpu.dma_semaphore, #tpu.memory_space<semaphore_mem>>) src(%arg0 : memref<2x4x16x16xf32, #tpu.memory_space<any>>) dst(%arg1 : memref<2x4x16x16xf32, #tpu.memory_space<any>>)
    return
  }
}

</mosaic_0001>

<llo_original>
// kernel: tpu_custom_call.1
$region0: #{tpu_custom_call.1}
  #allocation0 [shape = 'u32[]', space=smem, size = 0x4, offset = 0x4, fixed_abs, tag = 'smem constant byte address 0x4 - core index']
  #allocation1 [shape = 'u32[72,128]{1,0:T(1,128)}', space=vmem, size = 0x9000, scoped, tag = 'internal scratch']
  #allocation2 [shape = 's32[1]{0}', space=sflag, size = 0x4, scoped, tag = 'scratch operand']
  #allocation3 [shape = 's32[]', space=sflag, size = 0x4, offset = 0, fixed_abs, tag = 'sflag constant byte address 0x0 - dummy sync flag']
  #allocation4 [shape = 'u32[0]{0}', space=smem, size = 0, offset = 0, fixed_abs, tag = 'smem constant byte address 0x0 - null']
  %s0 = inlined_call_operand.hbm [shape: f32[2,4,16,16], index: 0, kind: input, shape index: {}]
  %s1 = inlined_call_operand.hbm [shape: f32[2,4,16,16], index: 1, kind: output, shape index: {}]
  %s2 = sld [smem:[#allocation0]]
  $region2: #{tpu_custom_call.1} parent=0
    _
  %s4 = ssub.s32 1, %s2
  %s5 = scalar_select 0, %s4, %s2
  %s7 = sshll.u32 1, 14
  %s8 = sxor.u32 4294967295, %s7
  %s10 = sshll.u32 %s0, 4
  %s11 = int_to_ptr.hbm [resolvable:$true] %s10
  %s12 = sshll.u32 %s1, 4
  %s13 = int_to_ptr.hbm [resolvable:$true] %s12
  %16 = dma.general %s11, 2048, %s13, [#allocation2], [#allocation3], [#allocation4], 0, 0
  %s17 = smul.u32 2, 4
  %s18 = smul.u32 %s17, 16
  %s19 = smul.u32 %s18, 1
  %s20 = sshll.u32 %s19, 4
  %21 = dma.done [#allocation2], %s20
  %22 = vsyncmov [#allocation2]
  %s23 = vpop.sfrf %22
  %p24 = scmp.eq.s32.totalorder %s23, 0
  %p25 = pneg %p24
  %27 = shalt.err (%p25)

</llo_original>
